<compile_context>
chip_gen: v6e
topology: v6e:2x2x1
jax: 0.10.0
libtpu: 0.0.40
codegen_flags: <defaults>
</compile_context>

<pallas_src>
import functools

import jax
import jax.numpy as jnp
from jax import lax
from jax.experimental import pallas as pl
from jax.experimental.pallas import tpu as pltpu


def _resblock_kernel(x_ref, mask_ref, w1_ref, b1_ref, w2_ref, b2_ref, o_ref,
                     *, K, H, W, C):
    """One grid step = one batch element, channels-first flattened layout.

    x_ref    : (1, C, H*W)   input image, lane-dense (flattened spatial on lanes)
    mask_ref : (K*K, H*W)    0/1 'same'-padding validity mask per conv tap
    w*_ref   : (C, K*K*C)    conv weights, rows = Cout, cols ordered (kh, kw, cin)
    b*_ref   : (C, 1)        biases (broadcast along lanes)
    o_ref    : (1, C, H*W)   output, lane-dense
    """
    P = K // 2

    def im2col_t(feat):
        # feat: (C, H*W) -> transposed im2col matrix (K*K*C, H*W).
        # A spatial tap offset (dh, dw) is a shift of dh*W + dw along the flattened
        # lane axis; wrap-around / out-of-image reads are zeroed by the mask, which
        # implements the conv's zero 'same' padding without any padded scratch.
        cols = []
        for kh in range(K):
            for kw in range(K):
                t = kh * K + kw
                delta = (kh - P) * W + (kw - P)
                shifted = feat if delta == 0 else jnp.roll(feat, -delta, axis=1)
                cols.append(shifted * mask_ref[t:t + 1, :])
        return jnp.concatenate(cols, axis=0)              # (K*K*C, H*W)

    xf = x_ref[0]                                         # (C, H*W), read once

    # conv1 + bias + relu : a single MXU matmul with contraction dim K*K*C.
    h1 = jnp.dot(w1_ref[...], im2col_t(xf),
                 preferred_element_type=jnp.float32) + b1_ref[...]
    h1 = jnp.maximum(h1, 0.0)

    # conv2 + bias + residual + relu : second single matmul, lane-dense store.
    h2 = jnp.dot(w2_ref[...], im2col_t(h1),
                 preferred_element_type=jnp.float32) + b2_ref[...]
    o_ref[0] = jnp.maximum(h2 + xf, 0.0)


def resblock_pallas(x_nchw, w1, b1, w2, b2, kernel_size):
    """x_nchw: (N, C, H, W) float32 (native PyTorch layout).
    w*: (Cout, Cin, K, K) PyTorch conv weights.  b*: (C,)."""
    N, C, H, W = x_nchw.shape
    K = kernel_size
    assert K % 2 == 1, "padding = K // 2 matches PyTorch behaviour only for odd K"
    P = K // 2
    HW = H * W

    # Free, row-major reshape: (N, C, H, W) -> (N, C, H*W); spatial lives on lanes.
    x_flat = x_nchw.reshape(N, C, HW).astype(jnp.float32)

    # (Cout, Cin, Kh, Kw) -> (Cout, Kh, Kw, Cin) -> (Cout, K*K*Cin); the column order
    # matches the row order of the in-kernel im2col matrix.
    w1m = jnp.transpose(w1, (0, 2, 3, 1)).reshape(C, K * K * C).astype(jnp.float32)
    w2m = jnp.transpose(w2, (0, 2, 3, 1)).reshape(C, K * K * C).astype(jnp.float32)
    b1c = b1.reshape(C, 1).astype(jnp.float32)
    b2c = b2.reshape(C, 1).astype(jnp.float32)

    # Per-tap 0/1 validity masks over flattened spatial positions (computed once,
    # shared by both convs): 1 where the shifted source pixel lies inside the image.
    hh = jnp.arange(H)[:, None]
    ww = jnp.arange(W)[None, :]
    masks = []
    for kh in range(K):
        for kw in range(K):
            dh, dw = kh - P, kw - P
            valid = ((hh + dh >= 0) & (hh + dh < H) &
                     (ww + dw >= 0) & (ww + dw < W))
            masks.append(valid.reshape(1, HW))
    masks = jnp.concatenate(masks, axis=0).astype(jnp.float32)   # (K*K, H*W)

    kernel = functools.partial(_resblock_kernel, K=K, H=H, W=W, C=C)

    out_flat = pl.pallas_call(
        kernel,
        out_shape=jax.ShapeDtypeStruct((N, C, HW), jnp.float32),
        grid_spec=pltpu.PrefetchScalarGridSpec(
            num_scalar_prefetch=0,
            grid=(N,),
            in_specs=[
                pl.BlockSpec((1, C, HW), lambda n: (n, 0, 0)),     # x (single HBM read)
                pl.BlockSpec((K * K, HW), lambda n: (0, 0)),       # padding masks
                pl.BlockSpec((C, K * K * C), lambda n: (0, 0)),    # w1
                pl.BlockSpec((C, 1), lambda n: (0, 0)),            # b1
                pl.BlockSpec((C, K * K * C), lambda n: (0, 0)),    # w2
                pl.BlockSpec((C, 1), lambda n: (0, 0)),            # b2
            ],
            out_specs=pl.BlockSpec((1, C, HW), lambda n: (n, 0, 0)),
        ),
        compiler_params=pltpu.CompilerParams(
            dimension_semantics=("parallel",)),   # 2-wide parallel axis -> both v7x TCs
    )(x_flat, masks, w1m, b1c, w2m, b2c)

    return out_flat.reshape(N, C, H, W)


def resblock_ref(x_nchw, w1, b1, w2, b2, kernel_size):
    """Pure-JAX reference mirroring the PyTorch forward (NCHW)."""
    P = kernel_size // 2
    dn = ("NCHW", "OIHW", "NCHW")
    f = lax.conv_general_dilated(x_nchw, w1, (1, 1), [(P, P), (P, P)],
                                 dimension_numbers=dn,
                                 precision=lax.Precision.HIGHEST)
    f = jnp.maximum(f + b1.reshape(1, -1, 1, 1), 0.0)
    f = lax.conv_general_dilated(f, w2, (1, 1), [(P, P), (P, P)],
                                 dimension_numbers=dn,
                                 precision=lax.Precision.HIGHEST)
    f = f + b2.reshape(1, -1, 1, 1)
    return jnp.maximum(f + x_nchw, 0.0)


if __name__ == "__main__":
    # Small deterministic problem: batch=2, channels=4, spatial=16x16, kernel_size=3.
    N, C, H, W = 2, 4, 16, 16
    K = 3

    key = jax.random.PRNGKey(0)
    kx, kw1, kb1, kw2, kb2 = jax.random.split(key, 5)

    x = jax.random.normal(kx, (N, C, H, W), dtype=jnp.float32)
    w1 = 0.1 * jax.random.normal(kw1, (C, C, K, K), dtype=jnp.float32)
    b1 = 0.1 * jax.random.normal(kb1, (C,), dtype=jnp.float32)
    w2 = 0.1 * jax.random.normal(kw2, (C, C, K, K), dtype=jnp.float32)
    b2 = 0.1 * jax.random.normal(kb2, (C,), dtype=jnp.float32)

    out = resblock_pallas(x, w1, b1, w2, b2, K)
    out = jax.block_until_ready(out)

    ref = resblock_ref(x, w1, b1, w2, b2, K)
    assert out.shape == ref.shape
    max_err = float(jnp.max(jnp.abs(out - ref)))
    assert jnp.allclose(out, ref, atol=2e-3, rtol=2e-3), max_err

    print("KERNEL_OK")
</pallas_src>

<mosaic_0001>
module attributes {stable_mosaic.version = 11 : i64} {
  func.func @_resblock_kernel(%arg0: i32, %arg1: memref<1x4x256xf32, #tpu.memory_space<vmem>>, %arg2: memref<9x256xf32, #tpu.memory_space<vmem>>, %arg3: memref<4x36xf32, #tpu.memory_space<vmem>>, %arg4: memref<4x1xf32, #tpu.memory_space<vmem>>, %arg5: memref<4x36xf32, #tpu.memory_space<vmem>>, %arg6: memref<4x1xf32, #tpu.memory_space<vmem>>, %arg7: memref<1x4x256xf32, #tpu.memory_space<vmem>>) attributes {dimension_semantics = [#tpu.dimension_semantics<parallel>], iteration_bounds = array<i64: 2>, scalar_prefetch = 0 : i64, scratch_operands = 0 : i64, tpu.core_type = #tpu.core_type<tc>, window_params = [{transform_indices = @transform_0, window_bounds = array<i64: 1, 4, 256>}, {pipeline_mode = #tpu.pipeline_mode<synchronous>, transform_indices = @transform_1, window_bounds = array<i64: 9, 256>}, {pipeline_mode = #tpu.pipeline_mode<synchronous>, transform_indices = @transform_2, window_bounds = array<i64: 4, 36>}, {pipeline_mode = #tpu.pipeline_mode<synchronous>, transform_indices = @transform_3, window_bounds = array<i64: 4, 1>}, {pipeline_mode = #tpu.pipeline_mode<synchronous>, transform_indices = @transform_4, window_bounds = array<i64: 4, 36>}, {pipeline_mode = #tpu.pipeline_mode<synchronous>, transform_indices = @transform_5, window_bounds = array<i64: 4, 1>}, {transform_indices = @transform_6, window_bounds = array<i64: 1, 4, 256>}]} {
    %c0 = arith.constant 0 : index
    %c0_0 = arith.constant 0 : index
    %c0_1 = arith.constant 0 : index
    %0 = vector.load %arg1[%c0, %c0_0, %c0_1] : memref<1x4x256xf32, #tpu.memory_space<vmem>>, vector<1x4x256xf32>
    %1 = vector.shape_cast %0 : vector<1x4x256xf32> to vector<4x256xf32>
    %c0_2 = arith.constant 0 : index
    %c0_3 = arith.constant 0 : index
    %2 = vector.load %arg3[%c0_2, %c0_3] : memref<4x36xf32, #tpu.memory_space<vmem>>, vector<4x36xf32>
    %3 = vector.extract_strided_slice %1 {offsets = [0, 239], sizes = [4, 17], strides = [1, 1]} : vector<4x256xf32> to vector<4x17xf32>
    %4 = vector.extract_strided_slice %1 {offsets = [0, 0], sizes = [4, 239], strides = [1, 1]} : vector<4x256xf32> to vector<4x239xf32>
    %5 = tpu.concatenate %3, %4 in 1 : vector<4x17xf32>, vector<4x239xf32> -> vector<4x256xf32>
    %c0_4 = arith.constant 0 : index
    %c0_5 = arith.constant 0 : index
    %6 = vector.load %arg2[%c0_4, %c0_5] : memref<9x256xf32, #tpu.memory_space<vmem>>, vector<1x256xf32>
    %7 = vector.broadcast %6 : vector<1x256xf32> to vector<4x256xf32>
    %8 = arith.mulf %5, %7 : vector<4x256xf32>
    %9 = vector.extract_strided_slice %1 {offsets = [0, 240], sizes = [4, 16], strides = [1, 1]} : vector<4x256xf32> to vector<4x16xf32>
    %10 = vector.extract_strided_slice %1 {offsets = [0, 0], sizes = [4, 240], strides = [1, 1]} : vector<4x256xf32> to vector<4x240xf32>
    %11 = tpu.concatenate %9, %10 in 1 : vector<4x16xf32>, vector<4x240xf32> -> vector<4x256xf32>
    %c1 = arith.constant 1 : index
    %c0_6 = arith.constant 0 : index
    %12 = vector.load %arg2[%c1, %c0_6] : memref<9x256xf32, #tpu.memory_space<vmem>>, vector<1x256xf32>
    %13 = vector.broadcast %12 : vector<1x256xf32> to vector<4x256xf32>
    %14 = arith.mulf %11, %13 : vector<4x256xf32>
    %15 = vector.extract_strided_slice %1 {offsets = [0, 241], sizes = [4, 15], strides = [1, 1]} : vector<4x256xf32> to vector<4x15xf32>
    %16 = vector.extract_strided_slice %1 {offsets = [0, 0], sizes = [4, 241], strides = [1, 1]} : vector<4x256xf32> to vector<4x241xf32>
    %17 = tpu.concatenate %15, %16 in 1 : vector<4x15xf32>, vector<4x241xf32> -> vector<4x256xf32>
    %c2 = arith.constant 2 : index
    %c0_7 = arith.constant 0 : index
    %18 = vector.load %arg2[%c2, %c0_7] : memref<9x256xf32, #tpu.memory_space<vmem>>, vector<1x256xf32>
    %19 = vector.broadcast %18 : vector<1x256xf32> to vector<4x256xf32>
    %20 = arith.mulf %17, %19 : vector<4x256xf32>
    %21 = vector.extract_strided_slice %1 {offsets = [0, 255], sizes = [4, 1], strides = [1, 1]} : vector<4x256xf32> to vector<4x1xf32>
    %22 = vector.extract_strided_slice %1 {offsets = [0, 0], sizes = [4, 255], strides = [1, 1]} : vector<4x256xf32> to vector<4x255xf32>
    %23 = tpu.concatenate %21, %22 in 1 : vector<4x1xf32>, vector<4x255xf32> -> vector<4x256xf32>
    %c3 = arith.constant 3 : index
    %c0_8 = arith.constant 0 : index
    %24 = vector.load %arg2[%c3, %c0_8] : memref<9x256xf32, #tpu.memory_space<vmem>>, vector<1x256xf32>
    %25 = vector.broadcast %24 : vector<1x256xf32> to vector<4x256xf32>
    %26 = arith.mulf %23, %25 : vector<4x256xf32>
    %c4 = arith.constant 4 : index
    %c0_9 = arith.constant 0 : index
    %27 = vector.load %arg2[%c4, %c0_9] : memref<9x256xf32, #tpu.memory_space<vmem>>, vector<1x256xf32>
    %28 = vector.broadcast %27 : vector<1x256xf32> to vector<4x256xf32>
    %29 = arith.mulf %1, %28 : vector<4x256xf32>
    %30 = vector.extract_strided_slice %1 {offsets = [0, 1], sizes = [4, 255], strides = [1, 1]} : vector<4x256xf32> to vector<4x255xf32>
    %31 = vector.extract_strided_slice %1 {offsets = [0, 0], sizes = [4, 1], strides = [1, 1]} : vector<4x256xf32> to vector<4x1xf32>
    %32 = tpu.concatenate %30, %31 in 1 : vector<4x255xf32>, vector<4x1xf32> -> vector<4x256xf32>
    %c5 = arith.constant 5 : index
    %c0_10 = arith.constant 0 : index
    %33 = vector.load %arg2[%c5, %c0_10] : memref<9x256xf32, #tpu.memory_space<vmem>>, vector<1x256xf32>
    %34 = vector.broadcast %33 : vector<1x256xf32> to vector<4x256xf32>
    %35 = arith.mulf %32, %34 : vector<4x256xf32>
    %36 = vector.extract_strided_slice %1 {offsets = [0, 15], sizes = [4, 241], strides = [1, 1]} : vector<4x256xf32> to vector<4x241xf32>
    %37 = vector.extract_strided_slice %1 {offsets = [0, 0], sizes = [4, 15], strides = [1, 1]} : vector<4x256xf32> to vector<4x15xf32>
    %38 = tpu.concatenate %36, %37 in 1 : vector<4x241xf32>, vector<4x15xf32> -> vector<4x256xf32>
    %c6 = arith.constant 6 : index
    %c0_11 = arith.constant 0 : index
    %39 = vector.load %arg2[%c6, %c0_11] : memref<9x256xf32, #tpu.memory_space<vmem>>, vector<1x256xf32>
    %40 = vector.broadcast %39 : vector<1x256xf32> to vector<4x256xf32>
    %41 = arith.mulf %38, %40 : vector<4x256xf32>
    %42 = vector.extract_strided_slice %1 {offsets = [0, 16], sizes = [4, 240], strides = [1, 1]} : vector<4x256xf32> to vector<4x240xf32>
    %43 = vector.extract_strided_slice %1 {offsets = [0, 0], sizes = [4, 16], strides = [1, 1]} : vector<4x256xf32> to vector<4x16xf32>
    %44 = tpu.concatenate %42, %43 in 1 : vector<4x240xf32>, vector<4x16xf32> -> vector<4x256xf32>
    %c7 = arith.constant 7 : index
    %c0_12 = arith.constant 0 : index
    %45 = vector.load %arg2[%c7, %c0_12] : memref<9x256xf32, #tpu.memory_space<vmem>>, vector<1x256xf32>
    %46 = vector.broadcast %45 : vector<1x256xf32> to vector<4x256xf32>
    %47 = arith.mulf %44, %46 : vector<4x256xf32>
    %48 = vector.extract_strided_slice %1 {offsets = [0, 17], sizes = [4, 239], strides = [1, 1]} : vector<4x256xf32> to vector<4x239xf32>
    %49 = vector.extract_strided_slice %1 {offsets = [0, 0], sizes = [4, 17], strides = [1, 1]} : vector<4x256xf32> to vector<4x17xf32>
    %50 = tpu.concatenate %48, %49 in 1 : vector<4x239xf32>, vector<4x17xf32> -> vector<4x256xf32>
    %c8 = arith.constant 8 : index
    %c0_13 = arith.constant 0 : index
    %51 = vector.load %arg2[%c8, %c0_13] : memref<9x256xf32, #tpu.memory_space<vmem>>, vector<1x256xf32>
    %52 = vector.broadcast %51 : vector<1x256xf32> to vector<4x256xf32>
    %53 = arith.mulf %50, %52 : vector<4x256xf32>
    %54 = tpu.concatenate %8, %14, %20, %26, %29, %35, %41, %47, %53 in 0 : vector<4x256xf32>, vector<4x256xf32>, vector<4x256xf32>, vector<4x256xf32>, vector<4x256xf32>, vector<4x256xf32>, vector<4x256xf32>, vector<4x256xf32>, vector<4x256xf32> -> vector<36x256xf32>
    %cst = arith.constant dense<0.000000e+00> : vector<4x256xf32>
    %55 = tpu.matmul %2, %54, %cst {dimension_numbers = #tpu.dot_dimension_numbers<[1], [0], [0], [1], [0, 0, 1, 1], [], []>} : vector<4x36xf32>, vector<36x256xf32>, vector<4x256xf32> -> vector<4x256xf32>
    %c0_14 = arith.constant 0 : index
    %c0_15 = arith.constant 0 : index
    %56 = vector.load %arg4[%c0_14, %c0_15] : memref<4x1xf32, #tpu.memory_space<vmem>>, vector<4x1xf32>
    %57 = vector.broadcast %56 : vector<4x1xf32> to vector<4x256xf32>
    %58 = arith.addf %55, %57 : vector<4x256xf32>
    %cst_16 = arith.constant 0.000000e+00 : f32
    %59 = vector.broadcast %cst_16 : f32 to vector<4x256xf32>
    %60 = arith.maximumf %58, %59 : vector<4x256xf32>
    %c0_17 = arith.constant 0 : index
    %c0_18 = arith.constant 0 : index
    %61 = vector.load %arg5[%c0_17, %c0_18] : memref<4x36xf32, #tpu.memory_space<vmem>>, vector<4x36xf32>
    %62 = vector.extract_strided_slice %60 {offsets = [0, 239], sizes = [4, 17], strides = [1, 1]} : vector<4x256xf32> to vector<4x17xf32>
    %63 = vector.extract_strided_slice %60 {offsets = [0, 0], sizes = [4, 239], strides = [1, 1]} : vector<4x256xf32> to vector<4x239xf32>
    %64 = tpu.concatenate %62, %63 in 1 : vector<4x17xf32>, vector<4x239xf32> -> vector<4x256xf32>
    %c0_19 = arith.constant 0 : index
    %c0_20 = arith.constant 0 : index
    %65 = vector.load %arg2[%c0_19, %c0_20] : memref<9x256xf32, #tpu.memory_space<vmem>>, vector<1x256xf32>
    %66 = vector.broadcast %65 : vector<1x256xf32> to vector<4x256xf32>
    %67 = arith.mulf %64, %66 : vector<4x256xf32>
    %68 = vector.extract_strided_slice %60 {offsets = [0, 240], sizes = [4, 16], strides = [1, 1]} : vector<4x256xf32> to vector<4x16xf32>
    %69 = vector.extract_strided_slice %60 {offsets = [0, 0], sizes = [4, 240], strides = [1, 1]} : vector<4x256xf32> to vector<4x240xf32>
    %70 = tpu.concatenate %68, %69 in 1 : vector<4x16xf32>, vector<4x240xf32> -> vector<4x256xf32>
    %c1_21 = arith.constant 1 : index
    %c0_22 = arith.constant 0 : index
    %71 = vector.load %arg2[%c1_21, %c0_22] : memref<9x256xf32, #tpu.memory_space<vmem>>, vector<1x256xf32>
    %72 = vector.broadcast %71 : vector<1x256xf32> to vector<4x256xf32>
    %73 = arith.mulf %70, %72 : vector<4x256xf32>
    %74 = vector.extract_strided_slice %60 {offsets = [0, 241], sizes = [4, 15], strides = [1, 1]} : vector<4x256xf32> to vector<4x15xf32>
    %75 = vector.extract_strided_slice %60 {offsets = [0, 0], sizes = [4, 241], strides = [1, 1]} : vector<4x256xf32> to vector<4x241xf32>
    %76 = tpu.concatenate %74, %75 in 1 : vector<4x15xf32>, vector<4x241xf32> -> vector<4x256xf32>
    %c2_23 = arith.constant 2 : index
    %c0_24 = arith.constant 0 : index
    %77 = vector.load %arg2[%c2_23, %c0_24] : memref<9x256xf32, #tpu.memory_space<vmem>>, vector<1x256xf32>
    %78 = vector.broadcast %77 : vector<1x256xf32> to vector<4x256xf32>
    %79 = arith.mulf %76, %78 : vector<4x256xf32>
    %80 = vector.extract_strided_slice %60 {offsets = [0, 255], sizes = [4, 1], strides = [1, 1]} : vector<4x256xf32> to vector<4x1xf32>
    %81 = vector.extract_strided_slice %60 {offsets = [0, 0], sizes = [4, 255], strides = [1, 1]} : vector<4x256xf32> to vector<4x255xf32>
    %82 = tpu.concatenate %80, %81 in 1 : vector<4x1xf32>, vector<4x255xf32> -> vector<4x256xf32>
    %c3_25 = arith.constant 3 : index
    %c0_26 = arith.constant 0 : index
    %83 = vector.load %arg2[%c3_25, %c0_26] : memref<9x256xf32, #tpu.memory_space<vmem>>, vector<1x256xf32>
    %84 = vector.broadcast %83 : vector<1x256xf32> to vector<4x256xf32>
    %85 = arith.mulf %82, %84 : vector<4x256xf32>
    %c4_27 = arith.constant 4 : index
    %c0_28 = arith.constant 0 : index
    %86 = vector.load %arg2[%c4_27, %c0_28] : memref<9x256xf32, #tpu.memory_space<vmem>>, vector<1x256xf32>
    %87 = vector.broadcast %86 : vector<1x256xf32> to vector<4x256xf32>
    %88 = arith.mulf %60, %87 : vector<4x256xf32>
    %89 = vector.extract_strided_slice %60 {offsets = [0, 1], sizes = [4, 255], strides = [1, 1]} : vector<4x256xf32> to vector<4x255xf32>
    %90 = vector.extract_strided_slice %60 {offsets = [0, 0], sizes = [4, 1], strides = [1, 1]} : vector<4x256xf32> to vector<4x1xf32>
    %91 = tpu.concatenate %89, %90 in 1 : vector<4x255xf32>, vector<4x1xf32> -> vector<4x256xf32>
    %c5_29 = arith.constant 5 : index
    %c0_30 = arith.constant 0 : index
    %92 = vector.load %arg2[%c5_29, %c0_30] : memref<9x256xf32, #tpu.memory_space<vmem>>, vector<1x256xf32>
    %93 = vector.broadcast %92 : vector<1x256xf32> to vector<4x256xf32>
    %94 = arith.mulf %91, %93 : vector<4x256xf32>
    %95 = vector.extract_strided_slice %60 {offsets = [0, 15], sizes = [4, 241], strides = [1, 1]} : vector<4x256xf32> to vector<4x241xf32>
    %96 = vector.extract_strided_slice %60 {offsets = [0, 0], sizes = [4, 15], strides = [1, 1]} : vector<4x256xf32> to vector<4x15xf32>
    %97 = tpu.concatenate %95, %96 in 1 : vector<4x241xf32>, vector<4x15xf32> -> vector<4x256xf32>
    %c6_31 = arith.constant 6 : index
    %c0_32 = arith.constant 0 : index
    %98 = vector.load %arg2[%c6_31, %c0_32] : memref<9x256xf32, #tpu.memory_space<vmem>>, vector<1x256xf32>
    %99 = vector.broadcast %98 : vector<1x256xf32> to vector<4x256xf32>
    %100 = arith.mulf %97, %99 : vector<4x256xf32>
    %101 = vector.extract_strided_slice %60 {offsets = [0, 16], sizes = [4, 240], strides = [1, 1]} : vector<4x256xf32> to vector<4x240xf32>
    %102 = vector.extract_strided_slice %60 {offsets = [0, 0], sizes = [4, 16], strides = [1, 1]} : vector<4x256xf32> to vector<4x16xf32>
    %103 = tpu.concatenate %101, %102 in 1 : vector<4x240xf32>, vector<4x16xf32> -> vector<4x256xf32>
    %c7_33 = arith.constant 7 : index
    %c0_34 = arith.constant 0 : index
    %104 = vector.load %arg2[%c7_33, %c0_34] : memref<9x256xf32, #tpu.memory_space<vmem>>, vector<1x256xf32>
    %105 = vector.broadcast %104 : vector<1x256xf32> to vector<4x256xf32>
    %106 = arith.mulf %103, %105 : vector<4x256xf32>
    %107 = vector.extract_strided_slice %60 {offsets = [0, 17], sizes = [4, 239], strides = [1, 1]} : vector<4x256xf32> to vector<4x239xf32>
    %108 = vector.extract_strided_slice %60 {offsets = [0, 0], sizes = [4, 17], strides = [1, 1]} : vector<4x256xf32> to vector<4x17xf32>
    %109 = tpu.concatenate %107, %108 in 1 : vector<4x239xf32>, vector<4x17xf32> -> vector<4x256xf32>
    %c8_35 = arith.constant 8 : index
    %c0_36 = arith.constant 0 : index
    %110 = vector.load %arg2[%c8_35, %c0_36] : memref<9x256xf32, #tpu.memory_space<vmem>>, vector<1x256xf32>
    %111 = vector.broadcast %110 : vector<1x256xf32> to vector<4x256xf32>
    %112 = arith.mulf %109, %111 : vector<4x256xf32>
    %113 = tpu.concatenate %67, %73, %79, %85, %88, %94, %100, %106, %112 in 0 : vector<4x256xf32>, vector<4x256xf32>, vector<4x256xf32>, vector<4x256xf32>, vector<4x256xf32>, vector<4x256xf32>, vector<4x256xf32>, vector<4x256xf32>, vector<4x256xf32> -> vector<36x256xf32>
    %cst_37 = arith.constant dense<0.000000e+00> : vector<4x256xf32>
    %114 = tpu.matmul %61, %113, %cst_37 {dimension_numbers = #tpu.dot_dimension_numbers<[1], [0], [0], [1], [0, 0, 1, 1], [], []>} : vector<4x36xf32>, vector<36x256xf32>, vector<4x256xf32> -> vector<4x256xf32>
    %c0_38 = arith.constant 0 : index
    %c0_39 = arith.constant 0 : index
    %115 = vector.load %arg6[%c0_38, %c0_39] : memref<4x1xf32, #tpu.memory_space<vmem>>, vector<4x1xf32>
    %116 = vector.broadcast %115 : vector<4x1xf32> to vector<4x256xf32>
    %117 = arith.addf %114, %116 : vector<4x256xf32>
    %118 = arith.addf %117, %1 : vector<4x256xf32>
    %cst_40 = arith.constant 0.000000e+00 : f32
    %119 = vector.broadcast %cst_40 : f32 to vector<4x256xf32>
    %120 = arith.maximumf %118, %119 : vector<4x256xf32>
    %c0_41 = arith.constant 0 : index
    %c0_42 = arith.constant 0 : index
    %c0_43 = arith.constant 0 : index
    %121 = vector.load %arg7[%c0_41, %c0_42, %c0_43] : memref<1x4x256xf32, #tpu.memory_space<vmem>>, vector<1x4x256xf32>
    %122 = vector.shape_cast %121 : vector<1x4x256xf32> to vector<4x256xf32>
    %123 = vector.shape_cast %120 : vector<4x256xf32> to vector<1x4x256xf32>
    tpu.vector_store %arg7[%c0_41, %c0_42, %c0_43], %123 {strides = array<i32>} : memref<1x4x256xf32, #tpu.memory_space<vmem>>, vector<1x4x256xf32>,
    return
  }
  func.func @transform_0(%arg0: i32) -> (i32, i32, i32) {
    %c0_i32 = arith.constant 0 : i32
    %c0_i32_0 = arith.constant 0 : i32
    %c0_i32_1 = arith.constant 0 : i32
    return %arg0, %c0_i32, %c0_i32_0 : i32, i32, i32
  }
  func.func @transform_1(%arg0: i32) -> (i32, i32) {
    %c0_i32 = arith.constant 0 : i32
    %c0_i32_0 = arith.constant 0 : i32
    %c0_i32_1 = arith.constant 0 : i32
    return %c0_i32, %c0_i32_0 : i32, i32
  }
  func.func @transform_2(%arg0: i32) -> (i32, i32) {
    %c0_i32 = arith.constant 0 : i32
    %c0_i32_0 = arith.constant 0 : i32
    %c0_i32_1 = arith.constant 0 : i32
    return %c0_i32, %c0_i32_0 : i32, i32
  }
  func.func @transform_3(%arg0: i32) -> (i32, i32) {
    %c0_i32 = arith.constant 0 : i32
    %c0_i32_0 = arith.constant 0 : i32
    %c0_i32_1 = arith.constant 0 : i32
    return %c0_i32, %c0_i32_0 : i32, i32
  }
  func.func @transform_4(%arg0: i32) -> (i32, i32) {
    %c0_i32 = arith.constant 0 : i32
    %c0_i32_0 = arith.constant 0 : i32
    %c0_i32_1 = arith.constant 0 : i32
    return %c0_i32, %c0_i32_0 : i32, i32
  }
  func.func @transform_5(%arg0: i32) -> (i32, i32) {
    %c0_i32 = arith.constant 0 : i32
    %c0_i32_0 = arith.constant 0 : i32
    %c0_i32_1 = arith.constant 0 : i32
    return %c0_i32, %c0_i32_0 : i32, i32
  }
  func.func @transform_6(%arg0: i32) -> (i32, i32, i32) {
    %c0_i32 = arith.constant 0 : i32
    %c0_i32_0 = arith.constant 0 : i32
    %c0_i32_1 = arith.constant 0 : i32
    return %arg0, %c0_i32, %c0_i32_0 : i32, i32, i32
  }
}

</mosaic_0001>

<llo_original>
// kernel: tpu_custom_call.1
$region0: #{tpu_custom_call.1}
  #allocation0 [shape = 'u32[]', space=smem, size = 0x4, offset = 0x4, fixed_abs, tag = 'smem constant byte address 0x4 - core index']
  #allocation1 [shape = 'u32[144,128]{1,0:T(1,128)}', space=vmem, size = 0x12000, scoped, tag = 'internal scratch']
  %s0 = inlined_call_operand.hbm [shape: f32[2,4,256], index: 0, kind: input, shape index: {}]
  %s1 = inlined_call_operand.hbm [shape: f32[9,256], index: 1, kind: input, shape index: {}]
  %s2 = inlined_call_operand.vmem [shape: f32[4,36], index: 2, kind: input, shape index: {}]
  %s3 = inlined_call_operand.vmem [shape: f32[4,1], index: 3, kind: input, shape index: {}]
  %s4 = inlined_call_operand.vmem [shape: f32[4,36], index: 4, kind: input, shape index: {}]
  %s5 = inlined_call_operand.vmem [shape: f32[4,1], index: 5, kind: input, shape index: {}]
  %s6 = inlined_call_operand.hbm [shape: f32[2,4,256], index: 6, kind: output, shape index: {}]
  %s7 = sld [smem:[#allocation0]]
  $region65: #{tpu_custom_call.1} parent=0
    _
  %s9 = ssub.s32 1, %s7
  %s10 = scalar_select 0, %s9, %s7
  $region1: #{tpu_custom_call.1} parent=0
    #allocation2 [shape = 'u8[8192]{0}', space=vmem, size = 0x2000, scoped, tag = 'input window, operand 0']
    #allocation3 [shape = 's32[2]{0}', space=sflag, size = 0x8, scoped, tag = 'scoped memory for tpu_custom_call.1']
    #allocation4 [shape = 's32[2]{0}', space=sflag, size = 0x8, scoped, tag = 'scoped memory for tpu_custom_call.1']
    #allocation5 [shape = 'u8[16384]{0}', space=vmem, size = 0x4000, scoped, tag = 'input window, operand 1, single buffered']
    #allocation6 [shape = 's32[1]{0}', space=sflag, size = 0x4, scoped, tag = 'scoped memory for tpu_custom_call.1']
    #allocation7 [shape = 'u8[8192]{0}', space=vmem, size = 0x2000, scoped, tag = 'output window, operand 0']
    %11 = vsyncpa [#allocation3], 0
    %s12 = scalar_lea.sflag [#allocation3], 1
    %13 = vsyncpa %s12, 0
    %14 = vsyncpa [#allocation6], 0
    %15 = vsyncpa [#allocation4], 0
    %s16 = scalar_lea.sflag [#allocation4], 1
    %17 = vsyncpa %s16, 0
    loop: start=0, step=1, limit=4
    $region2: #{tpu_custom_call.1} parent=1 // loop_pre_header
      _
    $region3: #{tpu_custom_call.1} parent=1 // loop_header
      %s19 = sphi 0, %s23
      %p20 = scmp.ge.s32.totalorder %s19, 4
      %s29 = sphi 0, %s31
      %s32 = sphi 0, %s29
      %s33 = sphi 0, %s32
      %s49 = sphi 0, %s33
      %s53 = sphi 0, %s53
      %s55 = sphi 0, %s53
      %s56 = sphi 0, %s55
      %s70 = sphi 0, %s56
      %s74 = sphi 0, %s74
      %s76 = sphi 0, %s74
      %s77 = sphi 0, %s76
      %s91 = sphi 0, %s77
      %s95 = sphi 0, %s95
      %s97 = sphi 0, %s95
      %s98 = sphi 0, %s97
      %s112 = sphi 0, %s98
      %s116 = sphi 0, %s116
      %s118 = sphi 0, %s116
      %s119 = sphi 0, %s118
      %s133 = sphi 0, %s119
      %s137 = sphi 0, %s137
      %s139 = sphi 0, %s137
      %s140 = sphi 0, %s139
      %s154 = sphi 0, %s140
      %s160 = sphi 0, %s162
      %s163 = sphi 0, %s160
      %s164 = sphi 0, %s163
      %s180 = sphi 0, %s164
    $region4: #{tpu_custom_call.1} parent=1 // loop_header_branch
      %22 = sbr.rel (%p20) target = $region8
    $region5: #{tpu_custom_call.1} parent=1 // loop_body
      %s24 = ssub.s32 %s19, 1
      %s25 = ssub.s32 %s19, 2
      %s26 = sadd.s32 %s19, 1
      %s27 = ssub.s32 %s19, %s26
      %p28 = scmp.eq.s32.totalorder %s27, 0
      %s30 = sadd.s32 %s29, 1
      %s31 = scalar_select %p28, %s29, %s30
      %p34 = pneg %p28
      %p35 = scmp.eq.s32.totalorder %s19, 1
      %p36 = por %p34, %p35
      %p37 = scmp.ne.s32.totalorder %s29, %s32
      %p38 = scmp.eq.s32.totalorder %s19, 0
      %p39 = por %p37, %p38
      %p40 = scmp.ne.s32.totalorder %s29, %s32
      %p41 = scmp.eq.s32.totalorder %s24, 1
      %p42 = por %p40, %p41
      %p43 = scmp.ne.s32.totalorder %s32, %s33
      %p44 = scmp.eq.s32.totalorder %s24, 0
      %p45 = por %p43, %p44
      %p46 = scmp.ne.s32.totalorder %s32, %s33
      %p47 = scmp.eq.s32.totalorder %s25, 1
      %p48 = por %p46, %p47
      %p50 = scmp.ne.s32.totalorder %s33, %s49
      %p51 = scmp.eq.s32.totalorder %s25, 0
      %p52 = por %p50, %p51
      %s54 = sadd.s32 %s53, 1
      %p57 = scmp.eq.s32.totalorder %s19, 1
      %p58 = scmp.ne.s32.totalorder %s53, %s55
      %p59 = scmp.eq.s32.totalorder %s19, 0
      %p60 = por %p58, %p59
      %p61 = scmp.ne.s32.totalorder %s53, %s55
      %p62 = scmp.eq.s32.totalorder %s24, 1
      %p63 = por %p61, %p62
      %p64 = scmp.ne.s32.totalorder %s55, %s56
      %p65 = scmp.eq.s32.totalorder %s24, 0
      %p66 = por %p64, %p65
      %p67 = scmp.ne.s32.totalorder %s55, %s56
      %p68 = scmp.eq.s32.totalorder %s25, 1
      %p69 = por %p67, %p68
      %p71 = scmp.ne.s32.totalorder %s56, %s70
      %p72 = scmp.eq.s32.totalorder %s25, 0
      %p73 = por %p71, %p72
      %s75 = sadd.s32 %s74, 1
      %p78 = scmp.eq.s32.totalorder %s19, 1
      %p79 = scmp.ne.s32.totalorder %s74, %s76
      %p80 = scmp.eq.s32.totalorder %s19, 0
      %p81 = por %p79, %p80
      %p82 = scmp.ne.s32.totalorder %s74, %s76
      %p83 = scmp.eq.s32.totalorder %s24, 1
      %p84 = por %p82, %p83
      %p85 = scmp.ne.s32.totalorder %s76, %s77
      %p86 = scmp.eq.s32.totalorder %s24, 0
      %p87 = por %p85, %p86
      %p88 = scmp.ne.s32.totalorder %s76, %s77
      %p89 = scmp.eq.s32.totalorder %s25, 1
      %p90 = por %p88, %p89
      %p92 = scmp.ne.s32.totalorder %s77, %s91
      %p93 = scmp.eq.s32.totalorder %s25, 0
      %p94 = por %p92, %p93
      %s96 = sadd.s32 %s95, 1
      %p99 = scmp.eq.s32.totalorder %s19, 1
      %p100 = scmp.ne.s32.totalorder %s95, %s97
      %p101 = scmp.eq.s32.totalorder %s19, 0
      %p102 = por %p100, %p101
      %p103 = scmp.ne.s32.totalorder %s95, %s97
      %p104 = scmp.eq.s32.totalorder %s24, 1
      %p105 = por %p103, %p104
      %p106 = scmp.ne.s32.totalorder %s97, %s98
      %p107 = scmp.eq.s32.totalorder %s24, 0
      %p108 = por %p106, %p107
      %p109 = scmp.ne.s32.totalorder %s97, %s98
      %p110 = scmp.eq.s32.totalorder %s25, 1
      %p111 = por %p109, %p110
      %p113 = scmp.ne.s32.totalorder %s98, %s112
      %p114 = scmp.eq.s32.totalorder %s25, 0
      %p115 = por %p113, %p114
      %s117 = sadd.s32 %s116, 1
      %p120 = scmp.eq.s32.totalorder %s19, 1
      %p121 = scmp.ne.s32.totalorder %s116, %s118
      %p122 = scmp.eq.s32.totalorder %s19, 0
      %p123 = por %p121, %p122
      %p124 = scmp.ne.s32.totalorder %s116, %s118
      %p125 = scmp.eq.s32.totalorder %s24, 1
      %p126 = por %p124, %p125
      %p127 = scmp.ne.s32.totalorder %s118, %s119
      %p128 = scmp.eq.s32.totalorder %s24, 0
      %p129 = por %p127, %p128
      %p130 = scmp.ne.s32.totalorder %s118, %s119
      %p131 = scmp.eq.s32.totalorder %s25, 1
      %p132 = por %p130, %p131
      %p134 = scmp.ne.s32.totalorder %s119, %s133
      %p135 = scmp.eq.s32.totalorder %s25, 0
      %p136 = por %p134, %p135
      %s138 = sadd.s32 %s137, 1
      %p141 = scmp.eq.s32.totalorder %s19, 1
      %p142 = scmp.ne.s32.totalorder %s137, %s139
      %p143 = scmp.eq.s32.totalorder %s19, 0
      %p144 = por %p142, %p143
      %p145 = scmp.ne.s32.totalorder %s137, %s139
      %p146 = scmp.eq.s32.totalorder %s24, 1
      %p147 = por %p145, %p146
      %p148 = scmp.ne.s32.totalorder %s139, %s140
      %p149 = scmp.eq.s32.totalorder %s24, 0
      %p150 = por %p148, %p149
      %p151 = scmp.ne.s32.totalorder %s139, %s140
      %p152 = scmp.eq.s32.totalorder %s25, 1
      %p153 = por %p151, %p152
      %p155 = scmp.ne.s32.totalorder %s140, %s154
      %p156 = scmp.eq.s32.totalorder %s25, 0
      %p157 = por %p155, %p156
      %s158 = ssub.s32 %s19, %s26
      %p159 = scmp.eq.s32.totalorder %s158, 0
      %s161 = sadd.s32 %s160, 1
      %s162 = scalar_select %p159, %s160, %s161
      %p165 = pneg %p159
      %p166 = scmp.eq.s32.totalorder %s19, 1
      %p167 = por %p165, %p166
      %p168 = scmp.ne.s32.totalorder %s160, %s163
      %p169 = scmp.eq.s32.totalorder %s19, 0
      %p170 = por %p168, %p169
      %p171 = scmp.ne.s32.totalorder %s160, %s163
      %p172 = scmp.eq.s32.totalorder %s24, 1
      %p173 = por %p171, %p172
      %p174 = scmp.ne.s32.totalorder %s163, %s164
      %p175 = scmp.eq.s32.totalorder %s24, 0
      %p176 = por %p174, %p175
      %p177 = scmp.ne.s32.totalorder %s163, %s164
      %p178 = scmp.eq.s32.totalorder %s25, 1
      %p179 = por %p177, %p178
      %p181 = scmp.ne.s32.totalorder %s164, %s180
      %p182 = scmp.eq.s32.totalorder %s25, 0
      %p183 = por %p181, %p182
      %p184 = scmp.le.s32.totalorder 1, %s19
      %p185 = scmp.lt.s32.totalorder %s19, 3
      %p186 = pnand %p184, %p185
      %p187 = pneg %p186
      // Predicated region
      $region9: #{tpu_custom_call.1} parent=5 // pred_check
        _
      $region10: #{tpu_custom_call.1} parent=5 // pred_check_branch
        %189 = sbr.rel (%p186) target = $region12
      $region11: #{tpu_custom_call.1} parent=5 // pred_region
        %s190 = ssub.s32 %s19, 1
        // Predicated region
        $region13: #{tpu_custom_call.1} parent=11 // pred_check
          %p191 = pneg %p66
        $region14: #{tpu_custom_call.1} parent=11 // pred_check_branch
          %193 = sbr.rel (%p191) target = $region16
        $region15: #{tpu_custom_call.1} parent=11 // pred_region
          %s195 = ssub.s32 512, 512
          %196 = vsyncadd [#allocation6], %s195
          %s197 = sshll.u32 [#allocation5], 4
          %s198 = int_to_ptr.vmem [resolvable:$true] %s197
          %203 = dma.hbm_to_vmem [thread:$0]  %s1, 512, %s198, [#allocation6], 256, 256, 16
        $region16: #{tpu_custom_call.1} parent=11 // pred_fallthru
          _
        // Predicated region
        $region17: #{tpu_custom_call.1} parent=11 // pred_check
          %p204 = pneg %p87
        $region18: #{tpu_custom_call.1} parent=11 // pred_check_branch
          %206 = sbr.rel (%p204) target = $region20
        $region19: #{tpu_custom_call.1} parent=11 // pred_region
          _
        $region20: #{tpu_custom_call.1} parent=11 // pred_fallthru
          _
        // Predicated region
        $region21: #{tpu_custom_call.1} parent=11 // pred_check
          %p207 = pneg %p108
        $region22: #{tpu_custom_call.1} parent=11 // pred_check_branch
          %209 = sbr.rel (%p207) target = $region24
        $region23: #{tpu_custom_call.1} parent=11 // pred_region
          _
        $region24: #{tpu_custom_call.1} parent=11 // pred_fallthru
          _
        // Predicated region
        $region25: #{tpu_custom_call.1} parent=11 // pred_check
          %p210 = pneg %p129
        $region26: #{tpu_custom_call.1} parent=11 // pred_check_branch
          %212 = sbr.rel (%p210) target = $region28
        $region27: #{tpu_custom_call.1} parent=11 // pred_region
          _
        $region28: #{tpu_custom_call.1} parent=11 // pred_fallthru
          _
        // Predicated region
        $region29: #{tpu_custom_call.1} parent=11 // pred_check
          %p213 = pneg %p150
        $region30: #{tpu_custom_call.1} parent=11 // pred_check_branch
          %215 = sbr.rel (%p213) target = $region32
        $region31: #{tpu_custom_call.1} parent=11 // pred_region
          _
        $region32: #{tpu_custom_call.1} parent=11 // pred_fallthru
          _
      $region12: #{tpu_custom_call.1} parent=5 // pred_fallthru
        _
      %p216 = scmp.lt.s32.totalorder %s19, 2
      // Predicated region
      $region33: #{tpu_custom_call.1} parent=5 // pred_check
        %p217 = pneg %p216
      $region34: #{tpu_custom_call.1} parent=5 // pred_check_branch
        %219 = sbr.rel (%p217) target = $region36
      $region35: #{tpu_custom_call.1} parent=5 // pred_region
        // Predicated region
        $region37: #{tpu_custom_call.1} parent=35 // pred_check
          %p220 = pneg %p39
        $region38: #{tpu_custom_call.1} parent=35 // pred_check_branch
          %222 = sbr.rel (%p220) target = $region40
        $region39: #{tpu_custom_call.1} parent=35 // pred_region
          %s223 = sand.u32 %s29, 1
          %s224 = scalar_lea.sflag [#allocation3], %s223
          %s225 = sand.u32 %s29, 1
          %s226 = smul.addr %s225, 8
          %s227 = scalar_lea.vmem [#allocation2], %s226
          %s229 = ssub.s32 128, 128
          %230 = vsyncadd %s224, %s229
          %s231 = smul.addr %s19, 2
          %s232 = smul.addr %s231, 64
          %s233 = scalar_lea.hbm %s0, %s232
          %s235 = sshll.u32 %s227, 4
          %s236 = int_to_ptr.vmem [resolvable:$true] %s235
          %238 = dma.hbm_to_vmem [thread:$0]  %s233, 128, %s236, %s224
        $region40: #{tpu_custom_call.1} parent=35 // pred_fallthru
          _
      $region36: #{tpu_custom_call.1} parent=5 // pred_fallthru
        _
      %p239 = scmp.le.s32.totalorder 1, %s19
      %p240 = scmp.lt.s32.totalorder %s19, 3
      %p241 = pnand %p239, %p240
      %p242 = pneg %p241
      // Predicated region
      $region41: #{tpu_custom_call.1} parent=5 // pred_check
        _
      $region42: #{tpu_custom_call.1} parent=5 // pred_check_branch
        %244 = sbr.rel (%p241) target = $region44
      $region43: #{tpu_custom_call.1} parent=5 // pred_region
        %s245 = ssub.s32 %s19, 1
        %s246 = sand.u32 %s32, 1
        %s247 = scalar_lea.sflag [#allocation3], %s246
        %s248 = sand.u32 %s32, 1
        %s249 = smul.addr %s248, 8
        %s250 = scalar_lea.vmem [#allocation2], %s249
        // Predicated region
        $region45: #{tpu_custom_call.1} parent=43 // pred_check
          %p251 = pneg %p45
        $region46: #{tpu_custom_call.1} parent=43 // pred_check_branch
          %253 = sbr.rel (%p251) target = $region48
        $region47: #{tpu_custom_call.1} parent=43 // pred_region
          %254 = dma.done %s247, 128
        $region48: #{tpu_custom_call.1} parent=43 // pred_fallthru
          _
        // Predicated region
        $region49: #{tpu_custom_call.1} parent=43 // pred_check
          %p255 = pneg %p66
        $region50: #{tpu_custom_call.1} parent=43 // pred_check_branch
          %257 = sbr.rel (%p255) target = $region52
        $region51: #{tpu_custom_call.1} parent=43 // pred_region
          %258 = dma.done [#allocation6], 512
        $region52: #{tpu_custom_call.1} parent=43 // pred_fallthru
          _
        %s259 = sand.u32 %s32, 1
        %s260 = scalar_lea.sflag [#allocation3], %s259
        %s261 = sand.u32 %s32, 1
        %s262 = smul.addr %s261, 8
        %s263 = scalar_lea.vmem [#allocation2], %s262
        %p264 = pneg %p45
        %p265 = pneg %p42
        %p266 = pneg %p66
        %p267 = pneg %p63
        %p268 = pneg %p87
        %p269 = pneg %p84
        %p270 = pneg %p108
        %p271 = pneg %p105
        %p272 = pneg %p129
        %p273 = pneg %p126
        %p274 = pneg %p150
        %p275 = pneg %p147
        %p276 = pneg %p176
        %p277 = pneg %p173
        %s278 = sand.u32 %s163, 1
        %s279 = scalar_lea.sflag [#allocation4], %s278
        %s280 = sand.u32 %s163, 1
        %s281 = smul.addr %s280, 8
        %s282 = scalar_lea.vmem [#allocation7], %s281
        %v283 = vld [vmem:[%s250] sm:$0xff]
        %v284 = vld [vmem:[%s2] sm:$0xf]
        %v286 = vcombine.high %v283, %v283
        %287 = vrot.lane.b32.xlu0 %v286, 17
        %v288 = vpop.permute.xlu0 %287
        %290 = vrot.lane.b32.xlu0 %v283, 17
        %v291 = vpop.permute.xlu0 %290
        %vm292 = vcmask 138240
        %v293 = vsel %vm292, %v291, %v288
        %v296 = vsel %vm292, %v288, %v291
        %v297 = vld [vmem:[#allocation5] ss:$8 sm:$0x3]
        %v299 = vlaneseq
        %v300 = vshrl.u32 %v299, 7
        %v301 = vsub.s32 0, %v300
        %v302 = vrot.slane %v297, %v301
        %v303 = vlaneseq
        %v304 = vshrl.u32 %v303, 7
        %v305 = vsub.s32 1, %v304
        %v306 = vrot.slane %v297, %v305
        %v309 = vmul.f32 %v296, %v302
        %v310 = vmul.f32 %v293, %v306
        %311 = vrot.lane.b32.xlu0 %v286, 16
        %v312 = vpop.permute.xlu0 %311
        %314 = vrot.lane.b32.xlu0 %v283, 16
        %v315 = vpop.permute.xlu0 %314
        %vm316 = vcmask 130048
        %v317 = vsel %vm316, %v315, %v312
        %v320 = vsel %vm316, %v312, %v315
        %s321 = scalar_lea.vmem [#allocation5], 1
        %v322 = vld [vmem:[%s321] ss:$8 sm:$0x3]
        %v324 = vlaneseq
        %v325 = vshrl.u32 %v324, 7
        %v326 = vsub.s32 0, %v325
        %v327 = vrot.slane %v322, %v326
        %v328 = vlaneseq
        %v329 = vshrl.u32 %v328, 7
        %v330 = vsub.s32 1, %v329
        %v331 = vrot.slane %v322, %v330
        %v334 = vmul.f32 %v320, %v327
        %v335 = vmul.f32 %v317, %v331
        %336 = vrot.lane.b32.xlu0 %v286, 15
        %v337 = vpop.permute.xlu0 %336
        %339 = vrot.lane.b32.xlu0 %v283, 15
        %v340 = vpop.permute.xlu0 %339
        %vm341 = vcmask 121856
        %v342 = vsel %vm341, %v340, %v337
        %v345 = vsel %vm341, %v337, %v340
        %s346 = scalar_lea.vmem [#allocation5], 2
        %v347 = vld [vmem:[%s346] ss:$8 sm:$0x3]
        %v349 = vlaneseq
        %v350 = vshrl.u32 %v349, 7
        %v351 = vsub.s32 0, %v350
        %v352 = vrot.slane %v347, %v351
        %v353 = vlaneseq
        %v354 = vshrl.u32 %v353, 7
        %v355 = vsub.s32 1, %v354
        %v356 = vrot.slane %v347, %v355
        %v359 = vmul.f32 %v345, %v352
        %v360 = vmul.f32 %v342, %v356
        %361 = vrot.lane.b32.xlu0 %v286, 1
        %v362 = vpop.permute.xlu0 %361
        %364 = vrot.lane.b32.xlu0 %v283, 1
        %v365 = vpop.permute.xlu0 %364
        %vm366 = vcmask 7168
        %v367 = vsel %vm366, %v365, %v362
        %v370 = vsel %vm366, %v362, %v365
        %s371 = scalar_lea.vmem [#allocation5], 3
        %v372 = vld [vmem:[%s371] ss:$8 sm:$0x3]
        %v374 = vlaneseq
        %v375 = vshrl.u32 %v374, 7
        %v376 = vsub.s32 0, %v375
        %v377 = vrot.slane %v372, %v376
        %v378 = vlaneseq
        %v379 = vshrl.u32 %v378, 7
        %v380 = vsub.s32 1, %v379
        %v381 = vrot.slane %v372, %v380
        %v384 = vmul.f32 %v370, %v377
        %v385 = vmul.f32 %v367, %v381
        %s386 = scalar_lea.vmem [#allocation5], 4
        %v387 = vld [vmem:[%s386] ss:$8 sm:$0x3]
        %v389 = vlaneseq
        %v390 = vshrl.u32 %v389, 7
        %v391 = vsub.s32 0, %v390
        %v392 = vrot.slane %v387, %v391
        %v393 = vlaneseq
        %v394 = vshrl.u32 %v393, 7
        %v395 = vsub.s32 1, %v394
        %v396 = vrot.slane %v387, %v395
        %v399 = vcombine.low %v392, %v396
        %v401 = vmul.f32 %v283, %v399
        %402 = vrot.lane.b32.xlu0 %v283, 127
        %v403 = vpop.permute.xlu0 %402
        %404 = vrot.lane.b32.xlu0 %v286, 127
        %v405 = vpop.permute.xlu0 %404
        %vm406 = vcmask 1039360
        %v407 = vsel %vm406, %v403, %v405
        %v411 = vsel %vm406, %v405, %v403
        %s412 = scalar_lea.vmem [#allocation5], 5
        %v413 = vld [vmem:[%s412] ss:$8 sm:$0x3]
        %v415 = vlaneseq
        %v416 = vshrl.u32 %v415, 7
        %v417 = vsub.s32 0, %v416
        %v418 = vrot.slane %v413, %v417
        %v419 = vlaneseq
        %v420 = vshrl.u32 %v419, 7
        %v421 = vsub.s32 1, %v420
        %v422 = vrot.slane %v413, %v421
        %v425 = vmul.f32 %v407, %v418
        %v426 = vmul.f32 %v411, %v422
        %427 = vrot.lane.b32.xlu0 %v283, 113
        %v428 = vpop.permute.xlu0 %427
        %429 = vrot.lane.b32.xlu0 %v286, 113
        %v430 = vpop.permute.xlu0 %429
        %vm431 = vcmask 924672
        %v432 = vsel %vm431, %v428, %v430
        %v436 = vsel %vm431, %v430, %v428
        %s437 = scalar_lea.vmem [#allocation5], 6
        %v438 = vld [vmem:[%s437] ss:$8 sm:$0x3]
        %v440 = vlaneseq
        %v441 = vshrl.u32 %v440, 7
        %v442 = vsub.s32 0, %v441
        %v443 = vrot.slane %v438, %v442
        %v444 = vlaneseq
        %v445 = vshrl.u32 %v444, 7
        %v446 = vsub.s32 1, %v445
        %v447 = vrot.slane %v438, %v446
        %v450 = vmul.f32 %v432, %v443
        %v451 = vmul.f32 %v436, %v447
        %452 = vrot.lane.b32.xlu0 %v283, 112
        %v453 = vpop.permute.xlu0 %452
        %454 = vrot.lane.b32.xlu0 %v286, 112
        %v455 = vpop.permute.xlu0 %454
        %vm456 = vcmask 916480
        %v457 = vsel %vm456, %v453, %v455
        %v461 = vsel %vm456, %v455, %v453
        %s462 = scalar_lea.vmem [#allocation5], 7
        %v463 = vld [vmem:[%s462] ss:$8 sm:$0x3]
        %v465 = vlaneseq
        %v466 = vshrl.u32 %v465, 7
        %v467 = vsub.s32 0, %v466
        %v468 = vrot.slane %v463, %v467
        %v469 = vlaneseq
        %v470 = vshrl.u32 %v469, 7
        %v471 = vsub.s32 1, %v470
        %v472 = vrot.slane %v463, %v471
        %v475 = vmul.f32 %v457, %v468
        %v476 = vmul.f32 %v461, %v472
        %477 = vrot.lane.b32.xlu0 %v283, 111
        %v478 = vpop.permute.xlu0 %477
        %479 = vrot.lane.b32.xlu0 %v286, 111
        %v480 = vpop.permute.xlu0 %479
        %vm481 = vcmask 908288
        %v482 = vsel %vm481, %v478, %v480
        %v486 = vsel %vm481, %v480, %v478
        %s487 = scalar_lea.vmem [#allocation5], 16
        %v488 = vld [vmem:[%s487] ss:$8 sm:$0x3]
        %v490 = vlaneseq
        %v491 = vshrl.u32 %v490, 7
        %v492 = vsub.s32 0, %v491
        %v493 = vrot.slane %v488, %v492
        %v494 = vlaneseq
        %v495 = vshrl.u32 %v494, 7
        %v496 = vsub.s32 1, %v495
        %v497 = vrot.slane %v488, %v496
        %v500 = vmul.f32 %v482, %v493
        %v501 = vmul.f32 %v486, %v497
        %v504 = vrot.slane %v334, 4
        %v505 = vrot.slane %v335, 4
        %v510 = vrot.slane %v384, 4
        %v511 = vrot.slane %v385, 4
        %v515 = vcombine.high %v401, %v401
        %v519 = vrot.slane %v425, 4
        %v520 = vrot.slane %v426, 4
        %v525 = vrot.slane %v475, 4
        %v526 = vrot.slane %v476, 4
        %vm529 = vcmask 1043456
        %v530 = vsel %vm529, %v309, %v504
        %v531 = vsel %vm529, %v310, %v505
        %v532 = vsel %vm529, %v359, %v510
        %v533 = vsel %vm529, %v360, %v511
        %v534 = vsel %vm529, %v401, %v519
        %v535 = vsel %vm529, %v515, %v520
        %v536 = vsel %vm529, %v450, %v525
        %v537 = vsel %vm529, %v451, %v526
        %v538 = vld [vmem:[%s3] sm:$0xf]
        %540 = vset.pattern.permute.xlu0 0
        %541 = vperm.xlu0 %540, %v538
        %v542 = vpop.permute.xlu0 %541
        %vm544 = vcmask 293888
        %v546 = vsel %vm544, %v284, 0
        %v549 = vsel %vm529, %v500, 0
        %v552 = vsel %vm529, %v501, 0
        %554 = vmatprep.subr.mxu0 0.0
        %555 = vmatpush1.msra.mxu0 0.0
        %556 = vmatprep.subr.mxu0 0.0
        %557 = vmatpush1.msra.mxu0 0.0
        %558 = vmatprep.subr.mxu0 0.0
        %559 = vmatpush1.msra.mxu0 0.0
        %560 = vmatprep.subr.mxu0 0.0
        %561 = vmatpush1.msra.mxu0 0.0
        %562 = vmatprep.subr.mxu0 0.0
        %563 = vmatpush1.msra.mxu0 0.0
        %564 = vmatprep.subr.mxu0 0.0
        %565 = vmatpush1.msra.mxu0 0.0
        %566 = vmatprep.subr.mxu0 0.0
        %567 = vmatpush1.msra.mxu0 0.0
        %568 = vmatprep.subr.mxu0 0.0
        %569 = vmatpush1.msra.mxu0 0.0
        %570 = vmatprep.subr.mxu0 0.0
        %571 = vmatpush1.msra.mxu0 0.0
        %572 = vmatprep.subr.mxu0 0.0
        %573 = vmatpush1.msra.mxu0 0.0
        %574 = vmatprep.subr.mxu0 0.0
        %575 = vmatpush1.msra.mxu0 0.0
        %576 = vmatprep.subr.mxu0 %v552
        %577 = vmatpush1.msra.mxu0 %v549
        %578 = vmatprep.subr.mxu0 %v537
        %579 = vmatpush1.msra.mxu0 %v536
        %580 = vmatprep.subr.mxu0 %v535
        %581 = vmatpush1.msra.mxu0 %v534
        %582 = vmatprep.subr.mxu0 %v533
        %583 = vmatpush1.msra.mxu0 %v532
        %584 = vmatprep.subr.mxu0 %v531
        %585 = vmatpush1.msra.mxu0 %v530
        %586 = vmatprep.subr.mxu0 0.0
        %587 = vmatpush2.msra.mxu0 0.0
        %588 = vmatprep.subr.mxu0 0.0
        %589 = vmatpush2.msra.mxu0 0.0
        %590 = vmatprep.subr.mxu0 0.0
        %591 = vmatpush2.msra.mxu0 0.0
        %592 = vmatprep.subr.mxu0 0.0
        %593 = vmatpush2.msra.mxu0 0.0
        %594 = vmatprep.subr.mxu0 0.0
        %595 = vmatpush2.msra.mxu0 0.0
        %596 = vmatprep.subr.mxu0 0.0
        %597 = vmatpush2.msra.mxu0 0.0
        %598 = vmatprep.subr.mxu0 0.0
        %599 = vmatpush2.msra.mxu0 0.0
        %600 = vmatprep.subr.mxu0 0.0
        %601 = vmatpush2.msra.mxu0 0.0
        %602 = vmatprep.subr.mxu0 0.0
        %603 = vmatpush2.msra.mxu0 0.0
        %604 = vmatprep.subr.mxu0 0.0
        %605 = vmatpush2.msra.mxu0 0.0
        %606 = vmatprep.subr.mxu0 0.0
        %607 = vmatpush2.msra.mxu0 0.0
        %608 = vmatprep.subr.mxu0 0.0
        %609 = vmatpush2.msra.mxu0 0.0
        %610 = vmatprep.subr.mxu0 0.0
        %611 = vmatpush2.msra.mxu0 0.0
        %612 = vmatprep.subr.mxu0 0.0
        %613 = vmatpush2.msra.mxu0 0.0
        %614 = vmatprep.subr.mxu0 0.0
        %615 = vmatpush2.msra.mxu0 0.0
        %616 = vmatprep.subr.mxu0 0.0
        %617 = vmatpush2.msra.mxu0 0.0
        %618 = vmatprep.mubr.f32.mxu0 0.0
        %619 = vmatmul.mubr.f32.gmra.mxu0 %v546
        %v620 = vpop.f32.mrf.mxu0
        %v621 = vadd.f32 %v542, %v620
        %v622 = vpop.f32.mrf.mxu0
        %v623 = vadd.f32 %v542, %v622
        %624 = vdwg.mxu0
        %v625 = vmax.f32 %v621, 0.0
        %v626 = vmax.f32 %v623, 0.0
        %v627 = vld [vmem:[%s4] sm:$0xf]
        %629 = vrot.lane.b32.xlu0 %v626, 17
        %v630 = vpop.permute.xlu0 %629
        %633 = vrot.lane.b32.xlu0 %v625, 17
        %v634 = vpop.permute.xlu0 %633
        %v635 = vsel %vm292, %v634, %v630
        %v638 = vsel %vm292, %v630, %v634
        %v639 = vmul.f32 %v638, %v302
        %v640 = vmul.f32 %v635, %v306
        %641 = vrot.lane.b32.xlu0 %v626, 16
        %v642 = vpop.permute.xlu0 %641
        %644 = vrot.lane.b32.xlu0 %v625, 16
        %v645 = vpop.permute.xlu0 %644
        %v646 = vsel %vm316, %v645, %v642
        %v649 = vsel %vm316, %v642, %v645
        %v650 = vmul.f32 %v649, %v327
        %v651 = vmul.f32 %v646, %v331
        %652 = vrot.lane.b32.xlu0 %v626, 15
        %v653 = vpop.permute.xlu0 %652
        %655 = vrot.lane.b32.xlu0 %v625, 15
        %v656 = vpop.permute.xlu0 %655
        %v657 = vsel %vm341, %v656, %v653
        %v660 = vsel %vm341, %v653, %v656
        %v661 = vmul.f32 %v660, %v352
        %v662 = vmul.f32 %v657, %v356
        %663 = vrot.lane.b32.xlu0 %v626, 1
        %v664 = vpop.permute.xlu0 %663
        %666 = vrot.lane.b32.xlu0 %v625, 1
        %v667 = vpop.permute.xlu0 %666
        %v668 = vsel %vm366, %v667, %v664
        %v671 = vsel %vm366, %v664, %v667
        %v672 = vmul.f32 %v671, %v377
        %v673 = vmul.f32 %v668, %v381
        %v674 = vmul.f32 %v625, %v392
        %v675 = vmul.f32 %v626, %v396
        %676 = vrot.lane.b32.xlu0 %v625, 127
        %v677 = vpop.permute.xlu0 %676
        %678 = vrot.lane.b32.xlu0 %v626, 127
        %v679 = vpop.permute.xlu0 %678
        %v680 = vsel %vm406, %v677, %v679
        %v684 = vsel %vm406, %v679, %v677
        %v685 = vmul.f32 %v680, %v418
        %v686 = vmul.f32 %v684, %v422
        %687 = vrot.lane.b32.xlu0 %v625, 113
        %v688 = vpop.permute.xlu0 %687
        %689 = vrot.lane.b32.xlu0 %v626, 113
        %v690 = vpop.permute.xlu0 %689
        %v691 = vsel %vm431, %v688, %v690
        %v695 = vsel %vm431, %v690, %v688
        %v696 = vmul.f32 %v691, %v443
        %v697 = vmul.f32 %v695, %v447
        %698 = vrot.lane.b32.xlu0 %v625, 112
        %v699 = vpop.permute.xlu0 %698
        %700 = vrot.lane.b32.xlu0 %v626, 112
        %v701 = vpop.permute.xlu0 %700
        %v702 = vsel %vm456, %v699, %v701
        %v706 = vsel %vm456, %v701, %v699
        %v707 = vmul.f32 %v702, %v468
        %v708 = vmul.f32 %v706, %v472
        %709 = vrot.lane.b32.xlu0 %v625, 111
        %v710 = vpop.permute.xlu0 %709
        %711 = vrot.lane.b32.xlu0 %v626, 111
        %v712 = vpop.permute.xlu0 %711
        %v713 = vsel %vm481, %v710, %v712
        %v717 = vsel %vm481, %v712, %v710
        %v718 = vmul.f32 %v713, %v493
        %v719 = vmul.f32 %v717, %v497
        %v722 = vrot.slane %v650, 4
        %v723 = vrot.slane %v651, 4
        %v728 = vrot.slane %v672, 4
        %v729 = vrot.slane %v673, 4
        %v734 = vrot.slane %v685, 4
        %v735 = vrot.slane %v686, 4
        %v740 = vrot.slane %v707, 4
        %v741 = vrot.slane %v708, 4
        %v744 = vsel %vm529, %v639, %v722
        %v745 = vsel %vm529, %v640, %v723
        %v746 = vsel %vm529, %v661, %v728
        %v747 = vsel %vm529, %v662, %v729
        %v748 = vsel %vm529, %v674, %v734
        %v749 = vsel %vm529, %v675, %v735
        %v750 = vsel %vm529, %v696, %v740
        %v751 = vsel %vm529, %v697, %v741
        %v752 = vld [vmem:[%s5] sm:$0xf]
        %754 = vset.pattern.permute.xlu0 0
        %755 = vperm.xlu0 %754, %v752
        %v756 = vpop.permute.xlu0 %755
        %v759 = vsel %vm544, %v627, 0
        %v762 = vsel %vm529, %v718, 0
        %v765 = vsel %vm529, %v719, 0
        %767 = vmatprep.subr.mxu0 0.0
        %768 = vmatpush1.msra.mxu0 0.0
        %769 = vmatprep.subr.mxu0 0.0
        %770 = vmatpush1.msra.mxu0 0.0
        %771 = vmatprep.subr.mxu0 0.0
        %772 = vmatpush1.msra.mxu0 0.0
        %773 = vmatprep.subr.mxu0 0.0
        %774 = vmatpush1.msra.mxu0 0.0
        %775 = vmatprep.subr.mxu0 0.0
        %776 = vmatpush1.msra.mxu0 0.0
        %777 = vmatprep.subr.mxu0 0.0
        %778 = vmatpush1.msra.mxu0 0.0
        %779 = vmatprep.subr.mxu0 0.0
        %780 = vmatpush1.msra.mxu0 0.0
        %781 = vmatprep.subr.mxu0 0.0
        %782 = vmatpush1.msra.mxu0 0.0
        %783 = vmatprep.subr.mxu0 0.0
        %784 = vmatpush1.msra.mxu0 0.0
        %785 = vmatprep.subr.mxu0 0.0
        %786 = vmatpush1.msra.mxu0 0.0
        %787 = vmatprep.subr.mxu0 0.0
        %788 = vmatpush1.msra.mxu0 0.0
        %789 = vmatprep.subr.mxu0 %v765
        %790 = vmatpush1.msra.mxu0 %v762
        %791 = vmatprep.subr.mxu0 %v751
        %792 = vmatpush1.msra.mxu0 %v750
        %793 = vmatprep.subr.mxu0 %v749
        %794 = vmatpush1.msra.mxu0 %v748
        %795 = vmatprep.subr.mxu0 %v747
        %796 = vmatpush1.msra.mxu0 %v746
        %797 = vmatprep.subr.mxu0 %v745
        %798 = vmatpush1.msra.mxu0 %v744
        %799 = vmatprep.subr.mxu0 0.0
        %800 = vmatpush2.msra.mxu0 0.0
        %801 = vmatprep.subr.mxu0 0.0
        %802 = vmatpush2.msra.mxu0 0.0
        %803 = vmatprep.subr.mxu0 0.0
        %804 = vmatpush2.msra.mxu0 0.0
        %805 = vmatprep.subr.mxu0 0.0
        %806 = vmatpush2.msra.mxu0 0.0
        %807 = vmatprep.subr.mxu0 0.0
        %808 = vmatpush2.msra.mxu0 0.0
        %809 = vmatprep.subr.mxu0 0.0
        %810 = vmatpush2.msra.mxu0 0.0
        %811 = vmatprep.subr.mxu0 0.0
        %812 = vmatpush2.msra.mxu0 0.0
        %813 = vmatprep.subr.mxu0 0.0
        %814 = vmatpush2.msra.mxu0 0.0
        %815 = vmatprep.subr.mxu0 0.0
        %816 = vmatpush2.msra.mxu0 0.0
        %817 = vmatprep.subr.mxu0 0.0
        %818 = vmatpush2.msra.mxu0 0.0
        %819 = vmatprep.subr.mxu0 0.0
        %820 = vmatpush2.msra.mxu0 0.0
        %821 = vmatprep.subr.mxu0 0.0
        %822 = vmatpush2.msra.mxu0 0.0
        %823 = vmatprep.subr.mxu0 0.0
        %824 = vmatpush2.msra.mxu0 0.0
        %825 = vmatprep.subr.mxu0 0.0
        %826 = vmatpush2.msra.mxu0 0.0
        %827 = vmatprep.subr.mxu0 0.0
        %828 = vmatpush2.msra.mxu0 0.0
        %829 = vmatprep.subr.mxu0 0.0
        %830 = vmatpush2.msra.mxu0 0.0
        %831 = vmatprep.mubr.f32.mxu0 0.0
        %832 = vmatmul.mubr.f32.gmra.mxu0 %v759
        %v833 = vpop.f32.mrf.mxu0
        %v834 = vadd.f32 %v756, %v833
        %v835 = vpop.f32.mrf.mxu0
        %v836 = vadd.f32 %v756, %v835
        %837 = vdwg.mxu0
        %v839 = vadd.f32 %v834, %v283
        %v840 = vadd.f32 %v836, %v286
        %v841 = vmax.f32 %v839, 0.0
        %v842 = vmax.f32 %v840, 0.0
        %v845 = vcombine.low %v841, %v842
        %847 = vst [vmem:[%s282] sm:$0xff] %v845
        %s848 = sand.u32 %s163, 1
        %s849 = scalar_lea.sflag [#allocation4], %s848
        %s850 = sand.u32 %s163, 1
        %s851 = smul.addr %s850, 8
        %s852 = scalar_lea.vmem [#allocation7], %s851
        // Predicated region
        $region53: #{tpu_custom_call.1} parent=43 // pred_check
          %p853 = pneg %p173
        $region54: #{tpu_custom_call.1} parent=43 // pred_check_branch
          %855 = sbr.rel (%p853) target = $region56
        $region55: #{tpu_custom_call.1} parent=43 // pred_region
          %s857 = ssub.s32 128, 128
          %858 = vsyncadd %s849, %s857
          %s859 = smul.addr %s24, 2
          %s860 = smul.addr %s859, 64
          %s861 = scalar_lea.hbm %s6, %s860
          %s863 = sshll.u32 %s852, 4
          %s864 = int_to_ptr.vmem [resolvable:$true] %s863
          %866 = dma.vmem_to_hbm [thread:$0]  %s864, 128, %s861, %s849
        $region56: #{tpu_custom_call.1} parent=43 // pred_fallthru
          _
      $region44: #{tpu_custom_call.1} parent=5 // pred_fallthru
        _
      %p867 = scmp.le.s32.totalorder 2, %s19
      // Predicated region
      $region57: #{tpu_custom_call.1} parent=5 // pred_check
        %p868 = pneg %p867
      $region58: #{tpu_custom_call.1} parent=5 // pred_check_branch
        %870 = sbr.rel (%p868) target = $region60
      $region59: #{tpu_custom_call.1} parent=5 // pred_region
        %s871 = ssub.s32 %s19, 2
        // Predicated region
        $region61: #{tpu_custom_call.1} parent=59 // pred_check
          %p872 = pneg %p179
        $region62: #{tpu_custom_call.1} parent=59 // pred_check_branch
          %874 = sbr.rel (%p872) target = $region64
        $region63: #{tpu_custom_call.1} parent=59 // pred_region
          %s875 = sand.u32 %s164, 1
          %s876 = scalar_lea.sflag [#allocation4], %s875
          %s877 = sand.u32 %s164, 1
          %s878 = smul.addr %s877, 8
          %s879 = scalar_lea.vmem [#allocation7], %s878
          %880 = dma.done %s876, 128
        $region64: #{tpu_custom_call.1} parent=59 // pred_fallthru
          _
      $region60: #{tpu_custom_call.1} parent=5 // pred_fallthru
        _
    $region6: #{tpu_custom_call.1} parent=1 // loop_footer
      %s23 = sadd.s32 1, %s19
    $region7: #{tpu_custom_call.1} parent=1 // loop_footer_branch
      %18 = sbr.rel target = $region3
    $region8: #{tpu_custom_call.1} parent=1 // loop_exit
      _
    %881 = vsyncpa [#allocation3], 1
    %s882 = scalar_lea.sflag [#allocation3], 1
    %883 = vsyncpa %s882, 1
    %884 = vsyncpa [#allocation6], 1
    %885 = vsyncpa [#allocation4], 1
    %s886 = scalar_lea.sflag [#allocation4], 1
    %887 = vsyncpa %s886, 1

</llo_original>
